<compile_context>
chip_gen: v5e
topology: v5e:2x2
jax: 0.10.0
libtpu: 0.0.40
codegen_flags: <defaults>
</compile_context>

<pallas_src>
import jax
import jax.numpy as jnp
from jax.experimental import pallas as pl
from jax.experimental.pallas import tpu as pltpu

F32 = jnp.float32


# --------------------------------------------------------------------------
# Kernel 1: encoder step + decoder initial state + hoisted input projection
# --------------------------------------------------------------------------
def _setup_kernel(xlast_ref, xdec_ref, wie_ref, bie_ref, wid_ref, bid_ref,
                  wh_ref, bh_ref, wc_ref, bc_ref,
                  h0_ref, c0_ref, gx_ref):
    # encoder: zero-state LSTMCell on the last timestep (only i, g, o needed)
    x_last = xlast_ref[...]                                            # (Bp, E)
    gi = jnp.dot(x_last, wie_ref[0], preferred_element_type=F32) + bie_ref[0]
    gg = jnp.dot(x_last, wie_ref[1], preferred_element_type=F32) + bie_ref[1]
    go = jnp.dot(x_last, wie_ref[2], preferred_element_type=F32) + bie_ref[2]
    c_emb = jax.nn.sigmoid(gi) * jnp.tanh(gg)
    h_emb = jax.nn.sigmoid(go) * jnp.tanh(c_emb)                       # feats_embed

    # decoder initial state: h = init_h(feats), c = init_c(feats)
    h0_ref[...] = jnp.dot(h_emb, wh_ref[...], preferred_element_type=F32) + bh_ref[...]
    c0_ref[...] = jnp.dot(h_emb, wc_ref[...], preferred_element_type=F32) + bc_ref[...]

    # hoisted decoder input projection for all decode steps at once.
    # x_dec is (Ldp*Bp, E) time-major; one GEMM per gate keeps i/f/g/o in
    # separate leading-dim slots (no unaligned lane slicing downstream) and the
    # decoder gate bias (b_ih + b_hh) is folded in here, off the recurrence.
    x_dec = xdec_ref[...]
    for k in range(4):                                                 # i, f, g, o
        gx_ref[k] = jnp.dot(x_dec, wid_ref[k],
                            preferred_element_type=F32) + bid_ref[k]


# --------------------------------------------------------------------------
# Kernel 2: serial decode recurrence + vocab projection + softmax
#   grid = (batch_chunks [parallel], time_chunks [arbitrary])
# --------------------------------------------------------------------------
def _decode_kernel(h0_ref, c0_ref, gx_ref, whh_ref, wo_ref, bo_ref,
                   out_ref, h_scr, c_scr):
    nt = pl.program_id(1)

    # new batch chunk -> (re)load the initial state from the setup kernel
    @pl.when(nt == 0)
    def _():
        h_scr[...] = h0_ref[...]
        c_scr[...] = c0_ref[...]

    h = h_scr[...]
    c = c_scr[...]
    w_i = whh_ref[0]
    w_f = whh_ref[1]
    w_g = whh_ref[2]
    w_o = whh_ref[3]
    wo = wo_ref[...]                       # (E, Vp), bf16 for the MXU
    # bias broadcast hoisted out of the unrolled time loop (no per-step
    # broadcast_in_dim); padded vocab lanes carry -1e30.
    bo = jnp.broadcast_to(bo_ref[...], (h_scr.shape[0], bo_ref.shape[1]))

    tt = gx_ref.shape[1]                   # static time-chunk length (<= 8)
    for lt in range(tt):                   # short fixed loop -> fully unrolled
        # Padded time steps (beyond the real decode length) only touch padded
        # output rows/steps that are sliced off in the wrapper; h/c is
        # re-initialized at the next batch chunk, so they are harmless.
        pre_i = gx_ref[0, lt] + jnp.dot(h, w_i, preferred_element_type=F32)
        pre_f = gx_ref[1, lt] + jnp.dot(h, w_f, preferred_element_type=F32)
        pre_g = gx_ref[2, lt] + jnp.dot(h, w_g, preferred_element_type=F32)
        pre_o = gx_ref[3, lt] + jnp.dot(h, w_o, preferred_element_type=F32)
        c = jax.nn.sigmoid(pre_f) * c + jax.nn.sigmoid(pre_i) * jnp.tanh(pre_g)
        h = jax.nn.sigmoid(pre_o) * jnp.tanh(c)

        logits = jnp.dot(h.astype(wo.dtype), wo,
                         preferred_element_type=F32) + bo
        m = jnp.max(logits, axis=-1, keepdims=True)
        e = jnp.exp(logits - m)
        denom = jnp.sum(e, axis=-1, keepdims=True)
        # EUP approximate reciprocal: rows sum to ~1 (inference-grade softmax)
        out_ref[:, lt, :] = e * pl.reciprocal(denom, approx=True)

    h_scr[...] = h
    c_scr[...] = c


# --------------------------------------------------------------------------
# Parameters (torch-layout) and wrapper
# --------------------------------------------------------------------------
def init_params(key, embed_dim, vocab_size):
    E, V = embed_dim, vocab_size
    ks = jax.random.split(key, 16)

    def u(k, shape, fan_in):
        bound = 1.0 / jnp.sqrt(jnp.float32(fan_in))
        return jax.random.uniform(k, shape, jnp.float32, -bound, bound)

    return {
        "embedding": jax.random.normal(ks[0], (V, E), jnp.float32),
        # encoder LSTMCell(embed_dim, embed_dim)
        "w_ih_enc": u(ks[1], (4 * E, E), E),
        "w_hh_enc": u(ks[2], (4 * E, E), E),   # mathematically unused (h0 = 0)
        "b_ih_enc": u(ks[3], (4 * E,), E),
        "b_hh_enc": u(ks[4], (4 * E,), E),
        # decoder LSTMCell(embed_dim, embed_dim)
        "w_ih_dec": u(ks[5], (4 * E, E), E),
        "w_hh_dec": u(ks[6], (4 * E, E), E),
        "b_ih_dec": u(ks[7], (4 * E,), E),
        "b_hh_dec": u(ks[8], (4 * E,), E),
        # init_h / init_c Linear(E, E)
        "w_init_h": u(ks[9], (E, E), E),
        "b_init_h": u(ks[10], (E,), E),
        "w_init_c": u(ks[11], (E, E), E),
        "b_init_c": u(ks[12], (E,), E),
        # linear Linear(E, V)
        "w_out": u(ks[13], (V, E), E),
        "b_out": u(ks[14], (V,), E),
        # `debedding` Linear(E, V) exists in __init__ but is never used in
        # forward, so it is omitted here.
    }


def _round_up(x, m):
    return (x + m - 1) // m * m


def words2sen_forward(params, words, captions, max_seq_length,
                      out_matmul_dtype=jnp.bfloat16):
    del captions  # torch computes captions_embed but never uses it
    emb = params["embedding"]                               # (V, E)
    V, E = emb.shape
    L = int(max_seq_length)
    B = words.shape[0]
    Ld = L - 1

    Vp = _round_up(V, 128)                                  # lane-dense output
    wo_bpe = jnp.dtype(out_matmul_dtype).itemsize
    vmem_cap = 64 << 20                                     # portable (v7x) cap
    vmem_budget = 40 << 20                                  # headroom for tiles

    # time chunk: either a full sublane group of 8 steps or the whole (short)
    # decode; keeps the (second-minor, minor) dims of the output block legal.
    TT = 8 if Ld >= 8 else Ld

    def _dec_vmem_bytes(tb, tt):
        return (2 * tb * tt * Vp * 4                      # out block (dbl-buf)
                + 2 * 4 * tt * tb * E * 4                 # gx block
                + 2 * 2 * tb * E * 4                      # h0/c0 blocks
                + 2 * (4 * E * E * 4                      # whh (resident)
                       + E * Vp * wo_bpe                  # wo  (resident)
                       + Vp * 4)                          # bo  (resident)
                + 2 * tb * E * 4)                         # h/c scratch

    # batch tile: grow for larger batches (amortizes per-grid-step overhead and
    # fattens the MXU M dim) but stay inside the VMEM budget; tiny batches -> 8.
    TB = 8
    for cand in (64, 32, 16):
        if _round_up(B, 8) >= cand and _dec_vmem_bytes(cand, TT) <= vmem_budget:
            TB = cand
            break
    # TODO(synk): for very large E*V the resident W_out no longer fits in VMEM;
    # that regime would need a vocab-tiled output projection (not needed here).

    Bp = _round_up(B, TB)
    NB = Bp // TB
    NT = pl.cdiv(Ld, TT)
    Ldp = NT * TT                                           # padded decode len

    # ---- embedding gathers (plain-JAX glue).  Only the tiny int index arrays
    # are transposed / flattened, so no extra HBM pass over embedded activations.
    words_p = jnp.pad(words[:, :L].astype(jnp.int32), ((0, Bp - B), (0, 0)))
    x_last = emb[words_p[:, L - 1]].astype(F32)                        # (Bp, E)
    words_dec = jnp.pad(words_p[:, :Ld], ((0, 0), (0, Ldp - Ld)))      # (Bp, Ldp)
    x_dec = emb[words_dec.T.reshape(-1)].astype(F32)                   # (Ldp*Bp, E)

    # ---- weight plumbing: per-gate (E, E) blocks, pre-transposed to (in, out)
    def gates_T(w, idxs):                 # w: (4E, E) torch LSTMCell weight
        return jnp.stack([w[k * E:(k + 1) * E, :].T for k in idxs])

    w_ie = gates_T(params["w_ih_enc"], (0, 2, 3)).astype(F32)          # i, g, o
    b_enc = (params["b_ih_enc"] + params["b_hh_enc"]).reshape(4, 1, E)
    b_ie = b_enc[jnp.array([0, 2, 3])].astype(F32)                     # (3,1,E)

    w_id = gates_T(params["w_ih_dec"], (0, 1, 2, 3)).astype(F32)       # (4,E,E)
    b_id = (params["b_ih_dec"] + params["b_hh_dec"]).reshape(4, 1, E).astype(F32)
    whh = gates_T(params["w_hh_dec"], (0, 1, 2, 3)).astype(F32)        # (4,E,E)

    w_h = params["w_init_h"].T.astype(F32)
    b_h = params["b_init_h"].reshape(1, E).astype(F32)
    w_c = params["w_init_c"].T.astype(F32)
    b_c = params["b_init_c"].reshape(1, E).astype(F32)

    # output projection: pad vocab to a lane multiple; padded logits get a
    # -1e30 bias so exp() underflows to 0 and the real-vocab softmax is exact.
    wo = jnp.pad(params["w_out"].T.astype(F32), ((0, 0), (0, Vp - V)))
    wo = wo.astype(out_matmul_dtype)                                   # bf16 on MXU
    bo = jnp.pad(params["b_out"].astype(F32), (0, Vp - V),
                 constant_values=-1e30).reshape(1, Vp)

    vspec = pl.BlockSpec(memory_space=pltpu.MemorySpace.VMEM)

    # ---- kernel 1: encoder + initial state + hoisted input projection
    setup_bytes = 4 * (x_last.size + x_dec.size + w_ie.size + b_ie.size +
                       w_id.size + b_id.size + w_h.size + b_h.size +
                       w_c.size + b_c.size + 2 * Bp * E + 4 * Ldp * Bp * E)
    h0, c0, gx2 = pl.pallas_call(
        _setup_kernel,
        out_shape=(jax.ShapeDtypeStruct((Bp, E), F32),
                   jax.ShapeDtypeStruct((Bp, E), F32),
                   jax.ShapeDtypeStruct((4, Ldp * Bp, E), F32)),
        in_specs=[vspec] * 10,
        out_specs=(vspec, vspec, vspec),
        compiler_params=pltpu.CompilerParams(
            vmem_limit_bytes=min(2 * setup_bytes + (8 << 20), vmem_cap)),
    )(x_last, x_dec, w_ie, b_ie, w_id, b_id, w_h, b_h, w_c, b_c)

    gx = gx2.reshape(4, Ldp, Bp, E)       # free: pure split of a leading dim

    # ---- kernel 2: decode recurrence (grid over batch/time chunks)
    out_pad = pl.pallas_call(
        _decode_kernel,
        out_shape=jax.ShapeDtypeStruct((Bp, Ldp, Vp), F32),
        grid_spec=pltpu.PrefetchScalarGridSpec(
            num_scalar_prefetch=0,
            grid=(NB, NT),
            in_specs=[
                pl.BlockSpec((TB, E), lambda nb, nt: (nb, 0)),               # h0
                pl.BlockSpec((TB, E), lambda nb, nt: (nb, 0)),               # c0
                pl.BlockSpec((4, TT, TB, E), lambda nb, nt: (0, nt, nb, 0)), # gx
                pl.BlockSpec((4, E, E), lambda nb, nt: (0, 0, 0)),           # whh
                pl.BlockSpec((E, Vp), lambda nb, nt: (0, 0)),                # wo
                pl.BlockSpec((1, Vp), lambda nb, nt: (0, 0)),                # bo
            ],
            out_specs=pl.BlockSpec((TB, TT, Vp), lambda nb, nt: (nb, nt, 0)),
            scratch_shapes=[pltpu.VMEM((TB, E), F32),
                            pltpu.VMEM((TB, E), F32)],
        ),
        compiler_params=pltpu.CompilerParams(
            dimension_semantics=("parallel", "arbitrary"),
            vmem_limit_bytes=min(_dec_vmem_bytes(TB, TT) + (8 << 20), vmem_cap),
        ),
    )(h0, c0, gx, whh, wo, bo)

    return out_pad[:B, :Ld, :V]           # (B, L-1, V) == torch `sentences`


# TODO(synk): the greedy `sample()` method (argmax feedback decoding) is not part
# of forward() and is not implemented here.

if __name__ == "__main__":
    B, E, V, L = 2, 32, 64, 8   # batch, embed_dim, vocab_size, max_seq_length
    key = jax.random.PRNGKey(0)
    kp, kw, kc = jax.random.split(key, 3)
    params = init_params(kp, E, V)
    words = jax.random.randint(kw, (B, L), 0, V, dtype=jnp.int32)
    captions = jax.random.randint(kc, (B, L), 0, V, dtype=jnp.int32)

    sentences = words2sen_forward(params, words, captions, max_seq_length=L)
    sentences = jax.block_until_ready(sentences)
    assert sentences.shape == (B, L - 1, V)
    assert sentences.dtype == jnp.float32
    assert bool(jnp.all(jnp.isfinite(sentences)))
    # softmax rows should sum to ~1 (approx-reciprocal -> loose tolerance)
    row_sums = jnp.sum(sentences, axis=-1)
    assert bool(jnp.max(jnp.abs(row_sums - 1.0)) < 1e-2)
    print("KERNEL_OK")
</pallas_src>

<mosaic_0001>
module attributes {stable_mosaic.version = 11 : i64} {
  func.func @_setup_kernel(%arg0: memref<8x32xf32, #tpu.memory_space<vmem>>, %arg1: memref<56x32xf32, #tpu.memory_space<vmem>>, %arg2: memref<3x32x32xf32, #tpu.memory_space<vmem>>, %arg3: memref<3x1x32xf32, #tpu.memory_space<vmem>>, %arg4: memref<4x32x32xf32, #tpu.memory_space<vmem>>, %arg5: memref<4x1x32xf32, #tpu.memory_space<vmem>>, %arg6: memref<32x32xf32, #tpu.memory_space<vmem>>, %arg7: memref<1x32xf32, #tpu.memory_space<vmem>>, %arg8: memref<32x32xf32, #tpu.memory_space<vmem>>, %arg9: memref<1x32xf32, #tpu.memory_space<vmem>>, %arg10: memref<8x32xf32, #tpu.memory_space<vmem>>, %arg11: memref<8x32xf32, #tpu.memory_space<vmem>>, %arg12: memref<4x56x32xf32, #tpu.memory_space<vmem>>) attributes {dimension_semantics = [], scalar_prefetch = 0 : i64, scratch_operands = 0 : i64, tpu.core_type = #tpu.core_type<tc>} {
    %c0 = arith.constant 0 : index
    %c0_0 = arith.constant 0 : index
    %0 = vector.load %arg0[%c0, %c0_0] : memref<8x32xf32, #tpu.memory_space<vmem>>, vector<8x32xf32>
    %c0_1 = arith.constant 0 : index
    %c0_2 = arith.constant 0 : index
    %c0_3 = arith.constant 0 : index
    %1 = vector.load %arg2[%c0_1, %c0_2, %c0_3] : memref<3x32x32xf32, #tpu.memory_space<vmem>>, vector<1x32x32xf32>
    %2 = vector.shape_cast %1 : vector<1x32x32xf32> to vector<32x32xf32>
    %cst = arith.constant dense<0.000000e+00> : vector<8x32xf32>
    %3 = tpu.matmul %0, %2, %cst {dimension_numbers = #tpu.dot_dimension_numbers<[1], [0], [0], [1], [0, 0, 1, 1], [], []>} : vector<8x32xf32>, vector<32x32xf32>, vector<8x32xf32> -> vector<8x32xf32>
    %c0_4 = arith.constant 0 : index
    %c0_5 = arith.constant 0 : index
    %c0_6 = arith.constant 0 : index
    %4 = vector.load %arg3[%c0_4, %c0_5, %c0_6] : memref<3x1x32xf32, #tpu.memory_space<vmem>>, vector<1x1x32xf32>
    %5 = vector.shape_cast %4 : vector<1x1x32xf32> to vector<1x32xf32>
    %6 = vector.broadcast %5 : vector<1x32xf32> to vector<8x32xf32>
    %7 = arith.addf %3, %6 : vector<8x32xf32>
    %c1 = arith.constant 1 : index
    %c0_7 = arith.constant 0 : index
    %c0_8 = arith.constant 0 : index
    %8 = vector.load %arg2[%c1, %c0_7, %c0_8] : memref<3x32x32xf32, #tpu.memory_space<vmem>>, vector<1x32x32xf32>
    %9 = vector.shape_cast %8 : vector<1x32x32xf32> to vector<32x32xf32>
    %cst_9 = arith.constant dense<0.000000e+00> : vector<8x32xf32>
    %10 = tpu.matmul %0, %9, %cst_9 {dimension_numbers = #tpu.dot_dimension_numbers<[1], [0], [0], [1], [0, 0, 1, 1], [], []>} : vector<8x32xf32>, vector<32x32xf32>, vector<8x32xf32> -> vector<8x32xf32>
    %c1_10 = arith.constant 1 : index
    %c0_11 = arith.constant 0 : index
    %c0_12 = arith.constant 0 : index
    %11 = vector.load %arg3[%c1_10, %c0_11, %c0_12] : memref<3x1x32xf32, #tpu.memory_space<vmem>>, vector<1x1x32xf32>
    %12 = vector.shape_cast %11 : vector<1x1x32xf32> to vector<1x32xf32>
    %13 = vector.broadcast %12 : vector<1x32xf32> to vector<8x32xf32>
    %14 = arith.addf %10, %13 : vector<8x32xf32>
    %c2 = arith.constant 2 : index
    %c0_13 = arith.constant 0 : index
    %c0_14 = arith.constant 0 : index
    %15 = vector.load %arg2[%c2, %c0_13, %c0_14] : memref<3x32x32xf32, #tpu.memory_space<vmem>>, vector<1x32x32xf32>
    %16 = vector.shape_cast %15 : vector<1x32x32xf32> to vector<32x32xf32>
    %cst_15 = arith.constant dense<0.000000e+00> : vector<8x32xf32>
    %17 = tpu.matmul %0, %16, %cst_15 {dimension_numbers = #tpu.dot_dimension_numbers<[1], [0], [0], [1], [0, 0, 1, 1], [], []>} : vector<8x32xf32>, vector<32x32xf32>, vector<8x32xf32> -> vector<8x32xf32>
    %c2_16 = arith.constant 2 : index
    %c0_17 = arith.constant 0 : index
    %c0_18 = arith.constant 0 : index
    %18 = vector.load %arg3[%c2_16, %c0_17, %c0_18] : memref<3x1x32xf32, #tpu.memory_space<vmem>>, vector<1x1x32xf32>
    %19 = vector.shape_cast %18 : vector<1x1x32xf32> to vector<1x32xf32>
    %20 = vector.broadcast %19 : vector<1x32xf32> to vector<8x32xf32>
    %21 = arith.addf %17, %20 : vector<8x32xf32>
    %22 = arith.negf %7 : vector<8x32xf32>
    %23 = math.exp %22 : vector<8x32xf32>
    %cst_19 = arith.constant 1.000000e+00 : f32
    %24 = vector.broadcast %cst_19 : f32 to vector<8x32xf32>
    %25 = arith.addf %24, %23 : vector<8x32xf32>
    %26 = arith.divf %24, %25 : vector<8x32xf32>
    %27 = math.tanh %14 : vector<8x32xf32>
    %28 = arith.mulf %26, %27 : vector<8x32xf32>
    %29 = arith.negf %21 : vector<8x32xf32>
    %30 = math.exp %29 : vector<8x32xf32>
    %cst_20 = arith.constant 1.000000e+00 : f32
    %31 = vector.broadcast %cst_20 : f32 to vector<8x32xf32>
    %32 = arith.addf %31, %30 : vector<8x32xf32>
    %33 = arith.divf %31, %32 : vector<8x32xf32>
    %34 = math.tanh %28 : vector<8x32xf32>
    %35 = arith.mulf %33, %34 : vector<8x32xf32>
    %c0_21 = arith.constant 0 : index
    %c0_22 = arith.constant 0 : index
    %36 = vector.load %arg6[%c0_21, %c0_22] : memref<32x32xf32, #tpu.memory_space<vmem>>, vector<32x32xf32>
    %cst_23 = arith.constant dense<0.000000e+00> : vector<8x32xf32>
    %37 = tpu.matmul %35, %36, %cst_23 {dimension_numbers = #tpu.dot_dimension_numbers<[1], [0], [0], [1], [0, 0, 1, 1], [], []>} : vector<8x32xf32>, vector<32x32xf32>, vector<8x32xf32> -> vector<8x32xf32>
    %c0_24 = arith.constant 0 : index
    %c0_25 = arith.constant 0 : index
    %38 = vector.load %arg7[%c0_24, %c0_25] : memref<1x32xf32, #tpu.memory_space<vmem>>, vector<1x32xf32>
    %39 = vector.broadcast %38 : vector<1x32xf32> to vector<8x32xf32>
    %40 = arith.addf %37, %39 : vector<8x32xf32>
    %c0_26 = arith.constant 0 : index
    %c0_27 = arith.constant 0 : index
    %41 = vector.load %arg10[%c0_26, %c0_27] : memref<8x32xf32, #tpu.memory_space<vmem>>, vector<8x32xf32>
    tpu.vector_store %arg10[%c0_26, %c0_27], %40 {strides = array<i32>} : memref<8x32xf32, #tpu.memory_space<vmem>>, vector<8x32xf32>,
    %c0_28 = arith.constant 0 : index
    %c0_29 = arith.constant 0 : index
    %42 = vector.load %arg8[%c0_28, %c0_29] : memref<32x32xf32, #tpu.memory_space<vmem>>, vector<32x32xf32>
    %cst_30 = arith.constant dense<0.000000e+00> : vector<8x32xf32>
    %43 = tpu.matmul %35, %42, %cst_30 {dimension_numbers = #tpu.dot_dimension_numbers<[1], [0], [0], [1], [0, 0, 1, 1], [], []>} : vector<8x32xf32>, vector<32x32xf32>, vector<8x32xf32> -> vector<8x32xf32>
    %c0_31 = arith.constant 0 : index
    %c0_32 = arith.constant 0 : index
    %44 = vector.load %arg9[%c0_31, %c0_32] : memref<1x32xf32, #tpu.memory_space<vmem>>, vector<1x32xf32>
    %45 = vector.broadcast %44 : vector<1x32xf32> to vector<8x32xf32>
    %46 = arith.addf %43, %45 : vector<8x32xf32>
    %c0_33 = arith.constant 0 : index
    %c0_34 = arith.constant 0 : index
    %47 = vector.load %arg11[%c0_33, %c0_34] : memref<8x32xf32, #tpu.memory_space<vmem>>, vector<8x32xf32>
    tpu.vector_store %arg11[%c0_33, %c0_34], %46 {strides = array<i32>} : memref<8x32xf32, #tpu.memory_space<vmem>>, vector<8x32xf32>,
    %c0_35 = arith.constant 0 : index
    %c0_36 = arith.constant 0 : index
    %48 = vector.load %arg1[%c0_35, %c0_36] : memref<56x32xf32, #tpu.memory_space<vmem>>, vector<56x32xf32>
    %c0_37 = arith.constant 0 : index
    %c0_38 = arith.constant 0 : index
    %c0_39 = arith.constant 0 : index
    %49 = vector.load %arg4[%c0_37, %c0_38, %c0_39] : memref<4x32x32xf32, #tpu.memory_space<vmem>>, vector<1x32x32xf32>
    %50 = vector.shape_cast %49 : vector<1x32x32xf32> to vector<32x32xf32>
    %cst_40 = arith.constant dense<0.000000e+00> : vector<56x32xf32>
    %51 = tpu.matmul %48, %50, %cst_40 {dimension_numbers = #tpu.dot_dimension_numbers<[1], [0], [0], [1], [0, 0, 1, 1], [], []>} : vector<56x32xf32>, vector<32x32xf32>, vector<56x32xf32> -> vector<56x32xf32>
    %c0_41 = arith.constant 0 : index
    %c0_42 = arith.constant 0 : index
    %c0_43 = arith.constant 0 : index
    %52 = vector.load %arg5[%c0_41, %c0_42, %c0_43] : memref<4x1x32xf32, #tpu.memory_space<vmem>>, vector<1x1x32xf32>
    %53 = vector.shape_cast %52 : vector<1x1x32xf32> to vector<1x32xf32>
    %54 = vector.broadcast %53 : vector<1x32xf32> to vector<56x32xf32>
    %55 = arith.addf %51, %54 : vector<56x32xf32>
    %c0_44 = arith.constant 0 : index
    %c0_45 = arith.constant 0 : index
    %c0_46 = arith.constant 0 : index
    %56 = vector.load %arg12[%c0_44, %c0_45, %c0_46] : memref<4x56x32xf32, #tpu.memory_space<vmem>>, vector<1x56x32xf32>
    %57 = vector.shape_cast %56 : vector<1x56x32xf32> to vector<56x32xf32>
    %58 = vector.shape_cast %55 : vector<56x32xf32> to vector<1x56x32xf32>
    tpu.vector_store %arg12[%c0_44, %c0_45, %c0_46], %58 {strides = array<i32>} : memref<4x56x32xf32, #tpu.memory_space<vmem>>, vector<1x56x32xf32>,
    %c1_47 = arith.constant 1 : index
    %c0_48 = arith.constant 0 : index
    %c0_49 = arith.constant 0 : index
    %59 = vector.load %arg4[%c1_47, %c0_48, %c0_49] : memref<4x32x32xf32, #tpu.memory_space<vmem>>, vector<1x32x32xf32>
    %60 = vector.shape_cast %59 : vector<1x32x32xf32> to vector<32x32xf32>
    %cst_50 = arith.constant dense<0.000000e+00> : vector<56x32xf32>
    %61 = tpu.matmul %48, %60, %cst_50 {dimension_numbers = #tpu.dot_dimension_numbers<[1], [0], [0], [1], [0, 0, 1, 1], [], []>} : vector<56x32xf32>, vector<32x32xf32>, vector<56x32xf32> -> vector<56x32xf32>
    %c1_51 = arith.constant 1 : index
    %c0_52 = arith.constant 0 : index
    %c0_53 = arith.constant 0 : index
    %62 = vector.load %arg5[%c1_51, %c0_52, %c0_53] : memref<4x1x32xf32, #tpu.memory_space<vmem>>, vector<1x1x32xf32>
    %63 = vector.shape_cast %62 : vector<1x1x32xf32> to vector<1x32xf32>
    %64 = vector.broadcast %63 : vector<1x32xf32> to vector<56x32xf32>
    %65 = arith.addf %61, %64 : vector<56x32xf32>
    %c1_54 = arith.constant 1 : index
    %c0_55 = arith.constant 0 : index
    %c0_56 = arith.constant 0 : index
    %66 = vector.load %arg12[%c1_54, %c0_55, %c0_56] : memref<4x56x32xf32, #tpu.memory_space<vmem>>, vector<1x56x32xf32>
    %67 = vector.shape_cast %66 : vector<1x56x32xf32> to vector<56x32xf32>
    %68 = vector.shape_cast %65 : vector<56x32xf32> to vector<1x56x32xf32>
    tpu.vector_store %arg12[%c1_54, %c0_55, %c0_56], %68 {strides = array<i32>} : memref<4x56x32xf32, #tpu.memory_space<vmem>>, vector<1x56x32xf32>,
    %c2_57 = arith.constant 2 : index
    %c0_58 = arith.constant 0 : index
    %c0_59 = arith.constant 0 : index
    %69 = vector.load %arg4[%c2_57, %c0_58, %c0_59] : memref<4x32x32xf32, #tpu.memory_space<vmem>>, vector<1x32x32xf32>
    %70 = vector.shape_cast %69 : vector<1x32x32xf32> to vector<32x32xf32>
    %cst_60 = arith.constant dense<0.000000e+00> : vector<56x32xf32>
    %71 = tpu.matmul %48, %70, %cst_60 {dimension_numbers = #tpu.dot_dimension_numbers<[1], [0], [0], [1], [0, 0, 1, 1], [], []>} : vector<56x32xf32>, vector<32x32xf32>, vector<56x32xf32> -> vector<56x32xf32>
    %c2_61 = arith.constant 2 : index
    %c0_62 = arith.constant 0 : index
    %c0_63 = arith.constant 0 : index
    %72 = vector.load %arg5[%c2_61, %c0_62, %c0_63] : memref<4x1x32xf32, #tpu.memory_space<vmem>>, vector<1x1x32xf32>
    %73 = vector.shape_cast %72 : vector<1x1x32xf32> to vector<1x32xf32>
    %74 = vector.broadcast %73 : vector<1x32xf32> to vector<56x32xf32>
    %75 = arith.addf %71, %74 : vector<56x32xf32>
    %c2_64 = arith.constant 2 : index
    %c0_65 = arith.constant 0 : index
    %c0_66 = arith.constant 0 : index
    %76 = vector.load %arg12[%c2_64, %c0_65, %c0_66] : memref<4x56x32xf32, #tpu.memory_space<vmem>>, vector<1x56x32xf32>
    %77 = vector.shape_cast %76 : vector<1x56x32xf32> to vector<56x32xf32>
    %78 = vector.shape_cast %75 : vector<56x32xf32> to vector<1x56x32xf32>
    tpu.vector_store %arg12[%c2_64, %c0_65, %c0_66], %78 {strides = array<i32>} : memref<4x56x32xf32, #tpu.memory_space<vmem>>, vector<1x56x32xf32>,
    %c3 = arith.constant 3 : index
    %c0_67 = arith.constant 0 : index
    %c0_68 = arith.constant 0 : index
    %79 = vector.load %arg4[%c3, %c0_67, %c0_68] : memref<4x32x32xf32, #tpu.memory_space<vmem>>, vector<1x32x32xf32>
    %80 = vector.shape_cast %79 : vector<1x32x32xf32> to vector<32x32xf32>
    %cst_69 = arith.constant dense<0.000000e+00> : vector<56x32xf32>
    %81 = tpu.matmul %48, %80, %cst_69 {dimension_numbers = #tpu.dot_dimension_numbers<[1], [0], [0], [1], [0, 0, 1, 1], [], []>} : vector<56x32xf32>, vector<32x32xf32>, vector<56x32xf32> -> vector<56x32xf32>
    %c3_70 = arith.constant 3 : index
    %c0_71 = arith.constant 0 : index
    %c0_72 = arith.constant 0 : index
    %82 = vector.load %arg5[%c3_70, %c0_71, %c0_72] : memref<4x1x32xf32, #tpu.memory_space<vmem>>, vector<1x1x32xf32>
    %83 = vector.shape_cast %82 : vector<1x1x32xf32> to vector<1x32xf32>
    %84 = vector.broadcast %83 : vector<1x32xf32> to vector<56x32xf32>
    %85 = arith.addf %81, %84 : vector<56x32xf32>
    %c3_73 = arith.constant 3 : index
    %c0_74 = arith.constant 0 : index
    %c0_75 = arith.constant 0 : index
    %86 = vector.load %arg12[%c3_73, %c0_74, %c0_75] : memref<4x56x32xf32, #tpu.memory_space<vmem>>, vector<1x56x32xf32>
    %87 = vector.shape_cast %86 : vector<1x56x32xf32> to vector<56x32xf32>
    %88 = vector.shape_cast %85 : vector<56x32xf32> to vector<1x56x32xf32>
    tpu.vector_store %arg12[%c3_73, %c0_74, %c0_75], %88 {strides = array<i32>} : memref<4x56x32xf32, #tpu.memory_space<vmem>>, vector<1x56x32xf32>,
    return
  }
}

</mosaic_0001>

<llo_original>
// kernel: tpu_custom_call.1
$region0: #{tpu_custom_call.1}
  #allocation0 [shape = 'u32[]', space=smem, size = 0x4, offset = 0x4, fixed_abs, tag = 'smem constant byte address 0x4 - core index']
  #allocation1 [shape = 'u32[72,128]{1,0:T(1,128)}', space=vmem, size = 0x9000, scoped, tag = 'internal scratch']
  %s0 = inlined_call_operand.vmem [shape: f32[8,32], index: 0, kind: input, shape index: {}]
  %s1 = inlined_call_operand.vmem [shape: f32[56,32], index: 1, kind: input, shape index: {}]
  %s2 = inlined_call_operand.hbm [shape: f32[3,32,32], index: 2, kind: input, shape index: {}]
  %s3 = inlined_call_operand.vmem [shape: f32[3,1,32], index: 3, kind: input, shape index: {}]
  %s4 = inlined_call_operand.hbm [shape: f32[4,32,32], index: 4, kind: input, shape index: {}]
  %s5 = inlined_call_operand.vmem [shape: f32[4,1,32], index: 5, kind: input, shape index: {}]
  %s6 = inlined_call_operand.vmem [shape: f32[32,32], index: 6, kind: input, shape index: {}]
  %s7 = inlined_call_operand.vmem [shape: f32[1,32], index: 7, kind: input, shape index: {}]
  %s8 = inlined_call_operand.vmem [shape: f32[32,32], index: 8, kind: input, shape index: {}]
  %s9 = inlined_call_operand.vmem [shape: f32[1,32], index: 9, kind: input, shape index: {}]
  %s10 = inlined_call_operand.hbm [shape: f32[8,32], index: 10, kind: output, shape index: {0}]
  %s11 = inlined_call_operand.hbm [shape: f32[8,32], index: 11, kind: output, shape index: {1}]
  %s12 = inlined_call_operand.vmem [shape: f32[4,56,32], index: 12, kind: output, shape index: {2}]
  %13 = xla_tuple %s10, %s11, %s12
  %s14 = sld [smem:[#allocation0]]
  $region74: #{tpu_custom_call.1} parent=0
    _
  %s16 = ssub.s32 1, %s14
  %s17 = scalar_select 0, %s16, %s14
  $region1: #{tpu_custom_call.1} parent=0
    #allocation2 [shape = 'u8[49152]{0}', space=vmem, size = 0xc000, scoped, tag = 'input window, operand 2, single buffered']
    #allocation3 [shape = 's32[1]{0}', space=sflag, size = 0x4, scoped, tag = 'scoped memory for tpu_custom_call.1']
    #allocation4 [shape = 's32[1]{0}', space=sflag, size = 0x4, scoped, tag = 'scoped memory for tpu_custom_call.1']
    #allocation5 [shape = 'u8[65536]{0}', space=vmem, size = 0x10000, scoped, tag = 'input window, operand 4, single buffered']
    #allocation6 [shape = 's32[1]{0}', space=sflag, size = 0x4, scoped, tag = 'scoped memory for tpu_custom_call.1']
    #allocation7 [shape = 'u8[4096]{0}', space=vmem, size = 0x1000, scoped, tag = 'output window, operand 0, single buffered']
    #allocation8 [shape = 'u8[4096]{0}', space=vmem, size = 0x1000, scoped, tag = 'output window, operand 1, single buffered']
    #allocation9 [shape = 's32[1]{0}', space=sflag, size = 0x4, scoped, tag = 'scoped memory for tpu_custom_call.1']
    %18 = vsyncpa [#allocation3], 0
    %19 = vsyncpa [#allocation6], 0
    %20 = vsyncpa [#allocation4], 0
    %21 = vsyncpa [#allocation9], 0
    // Predicated region
    $region2: #{tpu_custom_call.1} parent=1 // pred_check
      _
    $region3: #{tpu_custom_call.1} parent=1 // pred_check_branch
      %23 = sbr.rel (0) target = $region5
    $region4: #{tpu_custom_call.1} parent=1 // pred_region
      _
    $region5: #{tpu_custom_call.1} parent=1 // pred_fallthru
      _
    // Predicated region
    $region6: #{tpu_custom_call.1} parent=1 // pred_check
      _
    $region7: #{tpu_custom_call.1} parent=1 // pred_check_branch
      %25 = sbr.rel (0) target = $region9
    $region8: #{tpu_custom_call.1} parent=1 // pred_region
      _
    $region9: #{tpu_custom_call.1} parent=1 // pred_fallthru
      _
    // Predicated region
    $region10: #{tpu_custom_call.1} parent=1 // pred_check
      _
    $region11: #{tpu_custom_call.1} parent=1 // pred_check_branch
      %27 = sbr.rel (0) target = $region13
    $region12: #{tpu_custom_call.1} parent=1 // pred_region
      %29 = vsyncadd [#allocation3], 0
      %s30 = sshll.u32 %s2, 4
      %s31 = int_to_ptr.hbm [resolvable:$true] %s30
      %s32 = sshll.u32 [#allocation2], 4
      %s33 = int_to_ptr.vmem [resolvable:$true] %s32
      %38 = dma.hbm_to_vmem [thread:$0]  %s31, 1536, %s33, [#allocation3], 128, 128, 8
    $region13: #{tpu_custom_call.1} parent=1 // pred_fallthru
      _
    // Predicated region
    $region14: #{tpu_custom_call.1} parent=1 // pred_check
      _
    $region15: #{tpu_custom_call.1} parent=1 // pred_check_branch
      %40 = sbr.rel (0) target = $region17
    $region16: #{tpu_custom_call.1} parent=1 // pred_region
      _
    $region17: #{tpu_custom_call.1} parent=1 // pred_fallthru
      _
    // Predicated region
    $region18: #{tpu_custom_call.1} parent=1 // pred_check
      _
    $region19: #{tpu_custom_call.1} parent=1 // pred_check_branch
      %42 = sbr.rel (0) target = $region21
    $region20: #{tpu_custom_call.1} parent=1 // pred_region
      %44 = vsyncadd [#allocation6], 0
      %s45 = sshll.u32 %s4, 4
      %s46 = int_to_ptr.hbm [resolvable:$true] %s45
      %s47 = sshll.u32 [#allocation5], 4
      %s48 = int_to_ptr.vmem [resolvable:$true] %s47
      %53 = dma.hbm_to_vmem [thread:$0]  %s46, 2048, %s48, [#allocation6], 128, 128, 8
    $region21: #{tpu_custom_call.1} parent=1 // pred_fallthru
      _
    // Predicated region
    $region22: #{tpu_custom_call.1} parent=1 // pred_check
      _
    $region23: #{tpu_custom_call.1} parent=1 // pred_check_branch
      %55 = sbr.rel (0) target = $region25
    $region24: #{tpu_custom_call.1} parent=1 // pred_region
      _
    $region25: #{tpu_custom_call.1} parent=1 // pred_fallthru
      _
    // Predicated region
    $region26: #{tpu_custom_call.1} parent=1 // pred_check
      _
    $region27: #{tpu_custom_call.1} parent=1 // pred_check_branch
      %57 = sbr.rel (0) target = $region29
    $region28: #{tpu_custom_call.1} parent=1 // pred_region
      _
    $region29: #{tpu_custom_call.1} parent=1 // pred_fallthru
      _
    // Predicated region
    $region30: #{tpu_custom_call.1} parent=1 // pred_check
      _
    $region31: #{tpu_custom_call.1} parent=1 // pred_check_branch
      %59 = sbr.rel (0) target = $region33
    $region32: #{tpu_custom_call.1} parent=1 // pred_region
      _
    $region33: #{tpu_custom_call.1} parent=1 // pred_fallthru
      _
    // Predicated region
    $region34: #{tpu_custom_call.1} parent=1 // pred_check
      _
    $region35: #{tpu_custom_call.1} parent=1 // pred_check_branch
      %61 = sbr.rel (0) target = $region37
    $region36: #{tpu_custom_call.1} parent=1 // pred_region
      _
    $region37: #{tpu_custom_call.1} parent=1 // pred_fallthru
      _
    // Predicated region
    $region38: #{tpu_custom_call.1} parent=1 // pred_check
      _
    $region39: #{tpu_custom_call.1} parent=1 // pred_check_branch
      %63 = sbr.rel (0) target = $region41
    $region40: #{tpu_custom_call.1} parent=1 // pred_region
      _
    $region41: #{tpu_custom_call.1} parent=1 // pred_fallthru
      _
    // Predicated region
    $region42: #{tpu_custom_call.1} parent=1 // pred_check
      _
    $region43: #{tpu_custom_call.1} parent=1 // pred_check_branch
      %65 = sbr.rel (0) target = $region45
    $region44: #{tpu_custom_call.1} parent=1 // pred_region
      %67 = dma.done [#allocation3], 1536
    $region45: #{tpu_custom_call.1} parent=1 // pred_fallthru
      _
    // Predicated region
    $region46: #{tpu_custom_call.1} parent=1 // pred_check
      _
    $region47: #{tpu_custom_call.1} parent=1 // pred_check_branch
      %69 = sbr.rel (0) target = $region49
    $region48: #{tpu_custom_call.1} parent=1 // pred_region
      %71 = dma.done [#allocation6], 2048
    $region49: #{tpu_custom_call.1} parent=1 // pred_fallthru
      _
    %v72 = vld [vmem:[%s0] sm:$0xff]
    %v73 = vld [vmem:[#allocation2] sm:$0xff]
    %v74 = vld [vmem:[#allocation2 + $0x8] sm:$0xff]
    %v75 = vld [vmem:[#allocation2 + $0x10] sm:$0xff]
    %v76 = vld [vmem:[#allocation2 + $0x18] sm:$0xff]
    %v77 = vld [vmem:[%s3] sm:$0x1]
    %v79 = vperm.slane %v77, 0
    %vm81 = vcmask 261120
    %v83 = vsel %vm81, %v72, 0
    %85 = vmatpush.msra.mxu0 0.0
    %86 = vmatpush.msra.mxu0 0.0
    %87 = vmatpush.msra.mxu0 0.0
    %88 = vmatpush.msra.mxu0 0.0
    %89 = vmatpush.msra.mxu0 0.0
    %90 = vmatpush.msra.mxu0 0.0
    %91 = vmatpush.msra.mxu0 0.0
    %92 = vmatpush.msra.mxu0 0.0
    %93 = vmatpush.msra.mxu0 0.0
    %94 = vmatpush.msra.mxu0 0.0
    %95 = vmatpush.msra.mxu0 0.0
    %96 = vmatpush.msra.mxu0 0.0
    %97 = vmatpush.msra.mxu0 %v76
    %98 = vmatpush.msra.mxu0 %v75
    %99 = vmatpush.msra.mxu0 %v74
    %100 = vmatpush.msra.mxu0 %v73
    %101 = vmatmul.f32.gmra.mxu0 %v83
    %v102 = vpop.f32.mrf.mxu0
    %v103 = vadd.f32 %v79, %v102
    %104 = vdwg.mxu0
    %s105 = scalar_lea.vmem [#allocation2], 32
    %v106 = vld [vmem:[%s105] sm:$0xff]
    %v107 = vld [vmem:[%s105 + $0x8] sm:$0xff]
    %v108 = vld [vmem:[%s105 + $0x10] sm:$0xff]
    %v109 = vld [vmem:[%s105 + $0x18] sm:$0xff]
    %s110 = scalar_lea.vmem %s3, 1
    %v111 = vld [vmem:[%s110] sm:$0x1]
    %v113 = vperm.slane %v111, 0
    %115 = vmatpush.msra.mxu0 0.0
    %116 = vmatpush.msra.mxu0 0.0
    %117 = vmatpush.msra.mxu0 0.0
    %118 = vmatpush.msra.mxu0 0.0
    %119 = vmatpush.msra.mxu0 0.0
    %120 = vmatpush.msra.mxu0 0.0
    %121 = vmatpush.msra.mxu0 0.0
    %122 = vmatpush.msra.mxu0 0.0
    %123 = vmatpush.msra.mxu0 0.0
    %124 = vmatpush.msra.mxu0 0.0
    %125 = vmatpush.msra.mxu0 0.0
    %126 = vmatpush.msra.mxu0 0.0
    %127 = vmatpush.msra.mxu0 %v109
    %128 = vmatpush.msra.mxu0 %v108
    %129 = vmatpush.msra.mxu0 %v107
    %130 = vmatpush.msra.mxu0 %v106
    %131 = vmatmul.f32.gmra.mxu0 %v83
    %v132 = vpop.f32.mrf.mxu0
    %v133 = vadd.f32 %v113, %v132
    %134 = vdwg.mxu0
    %s135 = scalar_lea.vmem [#allocation2], 64
    %v136 = vld [vmem:[%s135] sm:$0xff]
    %v137 = vld [vmem:[%s135 + $0x8] sm:$0xff]
    %v138 = vld [vmem:[%s135 + $0x10] sm:$0xff]
    %v139 = vld [vmem:[%s135 + $0x18] sm:$0xff]
    %s140 = scalar_lea.vmem %s3, 2
    %v141 = vld [vmem:[%s140] sm:$0x1]
    %v143 = vperm.slane %v141, 0
    %145 = vmatpush.msra.mxu0 0.0
    %146 = vmatpush.msra.mxu0 0.0
    %147 = vmatpush.msra.mxu0 0.0
    %148 = vmatpush.msra.mxu0 0.0
    %149 = vmatpush.msra.mxu0 0.0
    %150 = vmatpush.msra.mxu0 0.0
    %151 = vmatpush.msra.mxu0 0.0
    %152 = vmatpush.msra.mxu0 0.0
    %153 = vmatpush.msra.mxu0 0.0
    %154 = vmatpush.msra.mxu0 0.0
    %155 = vmatpush.msra.mxu0 0.0
    %156 = vmatpush.msra.mxu0 0.0
    %157 = vmatpush.msra.mxu0 %v139
    %158 = vmatpush.msra.mxu0 %v138
    %159 = vmatpush.msra.mxu0 %v137
    %160 = vmatpush.msra.mxu0 %v136
    %161 = vmatmul.f32.gmra.mxu0 %v83
    %v162 = vpop.f32.mrf.mxu0
    %v163 = vadd.f32 %v143, %v162
    %164 = vdwg.mxu0
    %v165 = vxor.u32 %v103, 2147483648
    %v166 = vmul.f32 %v165, 1.442695
    %v167 = vpow.pop %v166
    %v168 = vadd.f32 %v167, 1.0
    %v169 = vrcp.pop %v168
    %v170 = vmul.f32 %v168, %v169
    %v171 = vsub.f32 1.0, %v170
    %v172 = vmul.f32 %v169, %v171
    %v173 = vadd.f32 %v169, %v172
    %vm174 = vweird.f32 %v168
    %vm175 = vweird.f32 %v169
    %vm176 = vmor %vm174, %vm175
    %v177 = vsel %vm176, %v169, %v173
    %v178 = vand.u32 2147483647, %v168
    %vm179 = vcmp.eq.f32.partialorder %v178, 8.507059e+37
    %v180 = vand.u32 %v168, 2147483648
    %v181 = vor.u32 1.1754944e-38, %v180
    %v182 = vsel %vm179, %v181, %v177
    %v183 = vmul.f32 1.0, %v182
    %v184 = vtanh.pop %v133
    %v185 = vmul.f32 %v183, %v184
    %v186 = vxor.u32 %v163, 2147483648
    %v187 = vmul.f32 %v186, 1.442695
    %v188 = vpow.pop %v187
    %v189 = vadd.f32 %v188, 1.0
    %v190 = vrcp.pop %v189
    %v191 = vmul.f32 %v189, %v190
    %v192 = vsub.f32 1.0, %v191
    %v193 = vmul.f32 %v190, %v192
    %v194 = vadd.f32 %v190, %v193
    %vm195 = vweird.f32 %v189
    %vm196 = vweird.f32 %v190
    %vm197 = vmor %vm195, %vm196
    %v198 = vsel %vm197, %v190, %v194
    %v199 = vand.u32 2147483647, %v189
    %vm200 = vcmp.eq.f32.partialorder %v199, 8.507059e+37
    %v201 = vand.u32 %v189, 2147483648
    %v202 = vor.u32 1.1754944e-38, %v201
    %v203 = vsel %vm200, %v202, %v198
    %v204 = vmul.f32 1.0, %v203
    %v205 = vtanh.pop %v185
    %v206 = vmul.f32 %v204, %v205
    %v207 = vld [vmem:[%s6] sm:$0xff]
    %v208 = vld [vmem:[%s6 + $0x8] sm:$0xff]
    %v209 = vld [vmem:[%s6 + $0x10] sm:$0xff]
    %v210 = vld [vmem:[%s6 + $0x18] sm:$0xff]
    %v211 = vld [vmem:[%s7] sm:$0x1]
    %v213 = vperm.slane %v211, 0
    %v216 = vsel %vm81, %v206, 0
    %218 = vmatpush.msra.mxu0 0.0
    %219 = vmatpush.msra.mxu0 0.0
    %220 = vmatpush.msra.mxu0 0.0
    %221 = vmatpush.msra.mxu0 0.0
    %222 = vmatpush.msra.mxu0 0.0
    %223 = vmatpush.msra.mxu0 0.0
    %224 = vmatpush.msra.mxu0 0.0
    %225 = vmatpush.msra.mxu0 0.0
    %226 = vmatpush.msra.mxu0 0.0
    %227 = vmatpush.msra.mxu0 0.0
    %228 = vmatpush.msra.mxu0 0.0
    %229 = vmatpush.msra.mxu0 0.0
    %230 = vmatpush.msra.mxu0 %v210
    %231 = vmatpush.msra.mxu0 %v209
    %232 = vmatpush.msra.mxu0 %v208
    %233 = vmatpush.msra.mxu0 %v207
    %234 = vmatmul.f32.gmra.mxu0 %v216
    %v235 = vpop.f32.mrf.mxu0
    %v236 = vadd.f32 %v213, %v235
    %237 = vdwg.mxu0
    %238 = vst.msk [vmem:[#allocation7] sm:$0xff] %vm81, %v236
    %v239 = vld [vmem:[%s8] sm:$0xff]
    %v240 = vld [vmem:[%s8 + $0x8] sm:$0xff]
    %v241 = vld [vmem:[%s8 + $0x10] sm:$0xff]
    %v242 = vld [vmem:[%s8 + $0x18] sm:$0xff]
    %v243 = vld [vmem:[%s9] sm:$0x1]
    %v245 = vperm.slane %v243, 0
    %247 = vmatpush.msra.mxu0 0.0
    %248 = vmatpush.msra.mxu0 0.0
    %249 = vmatpush.msra.mxu0 0.0
    %250 = vmatpush.msra.mxu0 0.0
    %251 = vmatpush.msra.mxu0 0.0
    %252 = vmatpush.msra.mxu0 0.0
    %253 = vmatpush.msra.mxu0 0.0
    %254 = vmatpush.msra.mxu0 0.0
    %255 = vmatpush.msra.mxu0 0.0
    %256 = vmatpush.msra.mxu0 0.0
    %257 = vmatpush.msra.mxu0 0.0
    %258 = vmatpush.msra.mxu0 0.0
    %259 = vmatpush.msra.mxu0 %v242
    %260 = vmatpush.msra.mxu0 %v241
    %261 = vmatpush.msra.mxu0 %v240
    %262 = vmatpush.msra.mxu0 %v239
    %263 = vmatmul.f32.gmra.mxu0 %v216
    %v264 = vpop.f32.mrf.mxu0
    %v265 = vadd.f32 %v245, %v264
    %266 = vdwg.mxu0
    %267 = vst.msk [vmem:[#allocation8] sm:$0xff] %vm81, %v265
    %v268 = vld [vmem:[%s1] sm:$0xff]
    %v269 = vld [vmem:[%s1 + $0x8] sm:$0xff]
    %v270 = vld [vmem:[%s1 + $0x10] sm:$0xff]
    %v271 = vld [vmem:[%s1 + $0x18] sm:$0xff]
    %v272 = vld [vmem:[%s1 + $0x20] sm:$0xff]
    %v273 = vld [vmem:[%s1 + $0x28] sm:$0xff]
    %v274 = vld [vmem:[%s1 + $0x30] sm:$0xff]
    %v275 = vld [vmem:[#allocation5] sm:$0xff]
    %v276 = vld [vmem:[#allocation5 + $0x8] sm:$0xff]
    %v277 = vld [vmem:[#allocation5 + $0x10] sm:$0xff]
    %v278 = vld [vmem:[#allocation5 + $0x18] sm:$0xff]
    %v279 = vld [vmem:[%s5] sm:$0x1]
    %v281 = vperm.slane %v279, 0
    %v284 = vsel %vm81, %v268, 0
    %v287 = vsel %vm81, %v269, 0
    %v290 = vsel %vm81, %v270, 0
    %v293 = vsel %vm81, %v271, 0
    %v296 = vsel %vm81, %v272, 0
    %v299 = vsel %vm81, %v273, 0
    %v302 = vsel %vm81, %v274, 0
    %304 = vmatpush.msra.mxu0 0.0
    %305 = vmatpush.msra.mxu0 0.0
    %306 = vmatpush.msra.mxu0 0.0
    %307 = vmatpush.msra.mxu0 0.0
    %308 = vmatpush.msra.mxu0 0.0
    %309 = vmatpush.msra.mxu0 0.0
    %310 = vmatpush.msra.mxu0 0.0
    %311 = vmatpush.msra.mxu0 0.0
    %312 = vmatpush.msra.mxu0 0.0
    %313 = vmatpush.msra.mxu0 0.0
    %314 = vmatpush.msra.mxu0 0.0
    %315 = vmatpush.msra.mxu0 0.0
    %316 = vmatpush.msra.mxu0 %v278
    %317 = vmatpush.msra.mxu0 %v277
    %318 = vmatpush.msra.mxu0 %v276
    %319 = vmatpush.msra.mxu0 %v275
    %320 = vmatmul.f32.gmra.mxu0 %v284
    %v321 = vpop.f32.mrf.mxu0
    %v322 = vadd.f32 %v281, %v321
    %323 = vmatmul.f32.gmra.mxu0 %v287
    %v324 = vpop.f32.mrf.mxu0
    %v325 = vadd.f32 %v281, %v324
    %326 = vmatmul.f32.gmra.mxu0 %v290
    %v327 = vpop.f32.mrf.mxu0
    %v328 = vadd.f32 %v281, %v327
    %329 = vmatmul.f32.gmra.mxu0 %v293
    %v330 = vpop.f32.mrf.mxu0
    %v331 = vadd.f32 %v281, %v330
    %332 = vmatmul.f32.gmra.mxu0 %v296
    %v333 = vpop.f32.mrf.mxu0
    %v334 = vadd.f32 %v281, %v333
    %335 = vmatmul.f32.gmra.mxu0 %v299
    %v336 = vpop.f32.mrf.mxu0
    %v337 = vadd.f32 %v281, %v336
    %338 = vmatmul.f32.gmra.mxu0 %v302
    %v339 = vpop.f32.mrf.mxu0
    %v340 = vadd.f32 %v281, %v339
    %341 = vdwg.mxu0
    %342 = vst.msk [vmem:[%s12] sm:$0xff] %vm81, %v322
    %343 = vst.msk [vmem:[%s12 + $0x8] sm:$0xff] %vm81, %v325
    %344 = vst.msk [vmem:[%s12 + $0x10] sm:$0xff] %vm81, %v328
    %345 = vst.msk [vmem:[%s12 + $0x18] sm:$0xff] %vm81, %v331
    %346 = vst.msk [vmem:[%s12 + $0x20] sm:$0xff] %vm81, %v334
    %347 = vst.msk [vmem:[%s12 + $0x28] sm:$0xff] %vm81, %v337
    %348 = vst.msk [vmem:[%s12 + $0x30] sm:$0xff] %vm81, %v340
    %s349 = scalar_lea.vmem [#allocation5], 32
    %v350 = vld [vmem:[%s349] sm:$0xff]
    %v351 = vld [vmem:[%s349 + $0x8] sm:$0xff]
    %v352 = vld [vmem:[%s349 + $0x10] sm:$0xff]
    %v353 = vld [vmem:[%s349 + $0x18] sm:$0xff]
    %s354 = scalar_lea.vmem %s5, 1
    %v355 = vld [vmem:[%s354] sm:$0x1]
    %v357 = vperm.slane %v355, 0
    %359 = vmatpush.msra.mxu0 0.0
    %360 = vmatpush.msra.mxu0 0.0
    %361 = vmatpush.msra.mxu0 0.0
    %362 = vmatpush.msra.mxu0 0.0
    %363 = vmatpush.msra.mxu0 0.0
    %364 = vmatpush.msra.mxu0 0.0
    %365 = vmatpush.msra.mxu0 0.0
    %366 = vmatpush.msra.mxu0 0.0
    %367 = vmatpush.msra.mxu0 0.0
    %368 = vmatpush.msra.mxu0 0.0
    %369 = vmatpush.msra.mxu0 0.0
    %370 = vmatpush.msra.mxu0 0.0
    %371 = vmatpush.msra.mxu0 %v353
    %372 = vmatpush.msra.mxu0 %v352
    %373 = vmatpush.msra.mxu0 %v351
    %374 = vmatpush.msra.mxu0 %v350
    %375 = vmatmul.f32.gmra.mxu0 %v284
    %v376 = vpop.f32.mrf.mxu0
    %v377 = vadd.f32 %v357, %v376
    %378 = vmatmul.f32.gmra.mxu0 %v287
    %v379 = vpop.f32.mrf.mxu0
    %v380 = vadd.f32 %v357, %v379
    %381 = vmatmul.f32.gmra.mxu0 %v290
    %v382 = vpop.f32.mrf.mxu0
    %v383 = vadd.f32 %v357, %v382
    %384 = vmatmul.f32.gmra.mxu0 %v293
    %v385 = vpop.f32.mrf.mxu0
    %v386 = vadd.f32 %v357, %v385
    %387 = vmatmul.f32.gmra.mxu0 %v296
    %v388 = vpop.f32.mrf.mxu0
    %v389 = vadd.f32 %v357, %v388
    %390 = vmatmul.f32.gmra.mxu0 %v299
    %v391 = vpop.f32.mrf.mxu0
    %v392 = vadd.f32 %v357, %v391
    %393 = vmatmul.f32.gmra.mxu0 %v302
    %v394 = vpop.f32.mrf.mxu0
    %v395 = vadd.f32 %v357, %v394
    %396 = vdwg.mxu0
    %s397 = scalar_lea.vmem %s12, 56
    %398 = vst.msk [vmem:[%s397] sm:$0xff] %vm81, %v377
    %399 = vst.msk [vmem:[%s397 + $0x8] sm:$0xff] %vm81, %v380
    %400 = vst.msk [vmem:[%s397 + $0x10] sm:$0xff] %vm81, %v383
    %401 = vst.msk [vmem:[%s397 + $0x18] sm:$0xff] %vm81, %v386
    %402 = vst.msk [vmem:[%s397 + $0x20] sm:$0xff] %vm81, %v389
    %403 = vst.msk [vmem:[%s397 + $0x28] sm:$0xff] %vm81, %v392
    %404 = vst.msk [vmem:[%s397 + $0x30] sm:$0xff] %vm81, %v395
    %s405 = scalar_lea.vmem [#allocation5], 64
    %v406 = vld [vmem:[%s405] sm:$0xff]
    %v407 = vld [vmem:[%s405 + $0x8] sm:$0xff]
    %v408 = vld [vmem:[%s405 + $0x10] sm:$0xff]
    %v409 = vld [vmem:[%s405 + $0x18] sm:$0xff]
    %s410 = scalar_lea.vmem %s5, 2
    %v411 = vld [vmem:[%s410] sm:$0x1]
    %v413 = vperm.slane %v411, 0
    %415 = vmatpush.msra.mxu0 0.0
    %416 = vmatpush.msra.mxu0 0.0
    %417 = vmatpush.msra.mxu0 0.0
    %418 = vmatpush.msra.mxu0 0.0
    %419 = vmatpush.msra.mxu0 0.0
    %420 = vmatpush.msra.mxu0 0.0
    %421 = vmatpush.msra.mxu0 0.0
    %422 = vmatpush.msra.mxu0 0.0
    %423 = vmatpush.msra.mxu0 0.0
    %424 = vmatpush.msra.mxu0 0.0
    %425 = vmatpush.msra.mxu0 0.0
    %426 = vmatpush.msra.mxu0 0.0
    %427 = vmatpush.msra.mxu0 %v409
    %428 = vmatpush.msra.mxu0 %v408
    %429 = vmatpush.msra.mxu0 %v407
    %430 = vmatpush.msra.mxu0 %v406
    %431 = vmatmul.f32.gmra.mxu0 %v284
    %v432 = vpop.f32.mrf.mxu0
    %v433 = vadd.f32 %v413, %v432
    %434 = vmatmul.f32.gmra.mxu0 %v287
    %v435 = vpop.f32.mrf.mxu0
    %v436 = vadd.f32 %v413, %v435
    %437 = vmatmul.f32.gmra.mxu0 %v290
    %v438 = vpop.f32.mrf.mxu0
    %v439 = vadd.f32 %v413, %v438
    %440 = vmatmul.f32.gmra.mxu0 %v293
    %v441 = vpop.f32.mrf.mxu0
    %v442 = vadd.f32 %v413, %v441
    %443 = vmatmul.f32.gmra.mxu0 %v296
    %v444 = vpop.f32.mrf.mxu0
    %v445 = vadd.f32 %v413, %v444
    %446 = vmatmul.f32.gmra.mxu0 %v299
    %v447 = vpop.f32.mrf.mxu0
    %v448 = vadd.f32 %v413, %v447
    %449 = vmatmul.f32.gmra.mxu0 %v302
    %v450 = vpop.f32.mrf.mxu0
    %v451 = vadd.f32 %v413, %v450
    %452 = vdwg.mxu0
    %s453 = scalar_lea.vmem %s12, 112
    %454 = vst.msk [vmem:[%s453] sm:$0xff] %vm81, %v433
    %455 = vst.msk [vmem:[%s453 + $0x8] sm:$0xff] %vm81, %v436
    %456 = vst.msk [vmem:[%s453 + $0x10] sm:$0xff] %vm81, %v439
    %457 = vst.msk [vmem:[%s453 + $0x18] sm:$0xff] %vm81, %v442
    %458 = vst.msk [vmem:[%s453 + $0x20] sm:$0xff] %vm81, %v445
    %459 = vst.msk [vmem:[%s453 + $0x28] sm:$0xff] %vm81, %v448
    %460 = vst.msk [vmem:[%s453 + $0x30] sm:$0xff] %vm81, %v451
    %s461 = scalar_lea.vmem [#allocation5], 96
    %v462 = vld [vmem:[%s461] sm:$0xff]
    %v463 = vld [vmem:[%s461 + $0x8] sm:$0xff]
    %v464 = vld [vmem:[%s461 + $0x10] sm:$0xff]
    %v465 = vld [vmem:[%s461 + $0x18] sm:$0xff]
    %s466 = scalar_lea.vmem %s5, 3
    %v467 = vld [vmem:[%s466] sm:$0x1]
    %v469 = vperm.slane %v467, 0
    %471 = vmatpush.msra.mxu0 0.0
    %472 = vmatpush.msra.mxu0 0.0
    %473 = vmatpush.msra.mxu0 0.0
    %474 = vmatpush.msra.mxu0 0.0
    %475 = vmatpush.msra.mxu0 0.0
    %476 = vmatpush.msra.mxu0 0.0
    %477 = vmatpush.msra.mxu0 0.0
    %478 = vmatpush.msra.mxu0 0.0
    %479 = vmatpush.msra.mxu0 0.0
    %480 = vmatpush.msra.mxu0 0.0
    %481 = vmatpush.msra.mxu0 0.0
    %482 = vmatpush.msra.mxu0 0.0
    %483 = vmatpush.msra.mxu0 %v465
    %484 = vmatpush.msra.mxu0 %v464
    %485 = vmatpush.msra.mxu0 %v463
    %486 = vmatpush.msra.mxu0 %v462
    %487 = vmatmul.f32.gmra.mxu0 %v284
    %v488 = vpop.f32.mrf.mxu0
    %v489 = vadd.f32 %v469, %v488
    %490 = vmatmul.f32.gmra.mxu0 %v287
    %v491 = vpop.f32.mrf.mxu0
    %v492 = vadd.f32 %v469, %v491
    %493 = vmatmul.f32.gmra.mxu0 %v290
    %v494 = vpop.f32.mrf.mxu0
    %v495 = vadd.f32 %v469, %v494
    %496 = vmatmul.f32.gmra.mxu0 %v293
    %v497 = vpop.f32.mrf.mxu0
    %v498 = vadd.f32 %v469, %v497
    %499 = vmatmul.f32.gmra.mxu0 %v296
    %v500 = vpop.f32.mrf.mxu0
    %v501 = vadd.f32 %v469, %v500
    %502 = vmatmul.f32.gmra.mxu0 %v299
    %v503 = vpop.f32.mrf.mxu0
    %v504 = vadd.f32 %v469, %v503
    %505 = vmatmul.f32.gmra.mxu0 %v302
    %v506 = vpop.f32.mrf.mxu0
    %v507 = vadd.f32 %v469, %v506
    %508 = vdwg.mxu0
    %s509 = scalar_lea.vmem %s12, 168
    %510 = vst.msk [vmem:[%s509] sm:$0xff] %vm81, %v489
    %511 = vst.msk [vmem:[%s509 + $0x8] sm:$0xff] %vm81, %v492
    %512 = vst.msk [vmem:[%s509 + $0x10] sm:$0xff] %vm81, %v495
    %513 = vst.msk [vmem:[%s509 + $0x18] sm:$0xff] %vm81, %v498
    %514 = vst.msk [vmem:[%s509 + $0x20] sm:$0xff] %vm81, %v501
    %515 = vst.msk [vmem:[%s509 + $0x28] sm:$0xff] %vm81, %v504
    %516 = vst.msk [vmem:[%s509 + $0x30] sm:$0xff] %vm81, %v507
    // Predicated region
    $region50: #{tpu_custom_call.1} parent=1 // pred_check
      _
    $region51: #{tpu_custom_call.1} parent=1 // pred_check_branch
      %518 = sbr.rel (0) target = $region53
    $region52: #{tpu_custom_call.1} parent=1 // pred_region
      %520 = vsyncadd [#allocation4], 0
      %s522 = sshll.u32 [#allocation7], 4
      %s523 = int_to_ptr.vmem [resolvable:$true] %s522
      %s524 = sshll.u32 %s10, 4
      %s525 = int_to_ptr.hbm [resolvable:$true] %s524
      %527 = dma.vmem_to_hbm [thread:$0]  %s523, 128, %s525, [#allocation4]
    $region53: #{tpu_custom_call.1} parent=1 // pred_fallthru
      _
    // Predicated region
    $region54: #{tpu_custom_call.1} parent=1 // pred_check
      _
    $region55: #{tpu_custom_call.1} parent=1 // pred_check_branch
      %529 = sbr.rel (0) target = $region57
    $region56: #{tpu_custom_call.1} parent=1 // pred_region
      %531 = vsyncadd [#allocation9], 0
      %s533 = sshll.u32 [#allocation8], 4
      %s534 = int_to_ptr.vmem [resolvable:$true] %s533
      %s535 = sshll.u32 %s11, 4
      %s536 = int_to_ptr.hbm [resolvable:$true] %s535
      %538 = dma.vmem_to_hbm [thread:$0]  %s534, 128, %s536, [#allocation9]
    $region57: #{tpu_custom_call.1} parent=1 // pred_fallthru
      _
    // Predicated region
    $region58: #{tpu_custom_call.1} parent=1 // pred_check
      _
    $region59: #{tpu_custom_call.1} parent=1 // pred_check_branch
      %540 = sbr.rel (0) target = $region61
    $region60: #{tpu_custom_call.1} parent=1 // pred_region
      _
    $region61: #{tpu_custom_call.1} parent=1 // pred_fallthru
      _
    // Predicated region
    $region62: #{tpu_custom_call.1} parent=1 // pred_check
      _
    $region63: #{tpu_custom_call.1} parent=1 // pred_check_branch
      %542 = sbr.rel (0) target = $region65
    $region64: #{tpu_custom_call.1} parent=1 // pred_region
      %544 = dma.done [#allocation4], 128
    $region65: #{tpu_custom_call.1} parent=1 // pred_fallthru
      _
    // Predicated region
    $region66: #{tpu_custom_call.1} parent=1 // pred_check
      _
    $region67: #{tpu_custom_call.1} parent=1 // pred_check_branch
      %546 = sbr.rel (0) target = $region69
    $region68: #{tpu_custom_call.1} parent=1 // pred_region
      %548 = dma.done [#allocation9], 128
    $region69: #{tpu_custom_call.1} parent=1 // pred_fallthru
      _
    // Predicated region
    $region70: #{tpu_custom_call.1} parent=1 // pred_check
      _
    $region71: #{tpu_custom_call.1} parent=1 // pred_check_branch
      %550 = sbr.rel (0) target = $region73
    $region72: #{tpu_custom_call.1} parent=1 // pred_region
      _
    $region73: #{tpu_custom_call.1} parent=1 // pred_fallthru
      _
    %551 = vsyncpa [#allocation3], 1
    %552 = vsyncpa [#allocation6], 1
    %553 = vsyncpa [#allocation4], 1
    %554 = vsyncpa [#allocation9], 1

</llo_original>
